<compile_context>
chip_gen: v5e
topology: v5e:2x2
jax: 0.10.0
libtpu: 0.0.40
codegen_flags: <defaults>
</compile_context>

<pallas_src>
import jax
import jax.numpy as jnp
from jax.experimental import pallas as pl
from jax.experimental.pallas import tpu as pltpu


def _round_up(x, m):
    return ((x + m - 1) // m) * m


def sae_kernel(x_ref,
               w1_ref, b1_ref,
               w2_ref, b2_ref,
               w3_ref, b3_ref,
               w4_ref, b4_ref,
               o_ref):
    """Whole SAE forward for one batch tile, fully in VMEM.

    The four matmuls run on the MXU with f32 accumulation; sigmoids go to the
    EUP.  Hidden dims (20, 10) are tiny, so all intermediates for a batch tile
    live in registers/VMEM.  Rows of a partial (masked) last batch tile are
    computed on unspecified data but never stored.
    """
    x = x_ref[...]

    h1 = jax.nn.sigmoid(
        jnp.dot(x, w1_ref[...], preferred_element_type=jnp.float32)
        + b1_ref[...])
    h2 = jax.nn.sigmoid(
        jnp.dot(h1, w2_ref[...], preferred_element_type=jnp.float32)
        + b2_ref[...])
    h3 = jax.nn.sigmoid(
        jnp.dot(h2, w3_ref[...], preferred_element_type=jnp.float32)
        + b3_ref[...])
    out = (jnp.dot(h3, w4_ref[...], preferred_element_type=jnp.float32)
           + b4_ref[...])

    o_ref[...] = out.astype(o_ref.dtype)


def sae_forward(x, params, *, batch_tile=None):
    """Tiles over the batch dimension; weights stay resident in VMEM.

    No padding / slicing of x or the output in the wrapper: BlockSpecs use
    the full (un-padded) feature width and Pallas masks the partial last
    batch tile, so the only HBM traffic is one read of x, one write of out,
    and one read of the (tiny) weights.
    """
    B, nb_movies = x.shape
    (w1, b1), (w2, b2), (w3, b3), (w4, b4) = params
    d1 = w1.shape[1]            # 20
    d2 = w2.shape[1]            # 10
    d3 = w3.shape[1]            # 20

    itemsize = x.dtype.itemsize
    row_bytes = nb_movies * itemsize
    weight_bytes = sum(int(a.size) * a.dtype.itemsize
                       for a in (w1, b1, w2, b2, w3, b3, w4, b4))

    # --- chip-aware VMEM budget ---------------------------------------------
    try:
        vmem_cap = int(pltpu.get_tpu_info().vmem_capacity_bytes)
    except Exception:
        vmem_cap = 64 << 20                     # conservative (v7x-sized)
    usable = (vmem_cap * 3) // 4                # leave headroom for the compiler
    # x + out tiles are double-buffered; weights counted at 2 buffers as well.
    io_budget = max(4 << 20, usable - 2 * weight_bytes - (4 << 20))

    # --- batch tile selection -------------------------------------------------
    if batch_tile is None:
        bt = io_budget // (4 * row_bytes)       # 2 bufs * (x tile + out tile)
        bt = max(8, min(2048, (bt // 8) * 8))
        # Ensure >= 2 real tiles when there is enough work, so a second
        # TensorCore (v7x megacore) is not idle under "parallel" semantics.
        if B > 16 and pl.cdiv(B, bt) < 2:
            bt = max(8, _round_up(pl.cdiv(B, 2), 8))
        batch_tile = bt
    batch_tile = max(8, _round_up(batch_tile, 8))
    batch_tile = min(batch_tile, _round_up(B, 8))

    n_tiles = pl.cdiv(B, batch_tile)            # partial last tile is masked

    # --- scoped VMEM limit / cost estimate ------------------------------------
    io_vmem = 4 * batch_tile * row_bytes
    need = io_vmem + 2 * weight_bytes
    vmem_limit = int(min(max(need + (8 << 20), 32 << 20), usable))

    flops = 2 * B * (nb_movies * d1 + d1 * d2 + d2 * d3 + d3 * nb_movies)
    transcendentals = B * (d1 + d2 + d3)
    bytes_accessed = 2 * B * row_bytes + weight_bytes

    def resident(arr):
        # Whole-array block, same block index every grid step -> DMA'd once,
        # stays resident in VMEM for the entire grid.
        n = arr.ndim
        return pl.BlockSpec(arr.shape, lambda i, _n=n: (0,) * _n)

    in_specs = [
        pl.BlockSpec((batch_tile, nb_movies), lambda i: (i, 0)),   # x tile
        resident(w1), resident(b1),
        resident(w2), resident(b2),
        resident(w3), resident(b3),
        resident(w4), resident(b4),
    ]
    out_spec = pl.BlockSpec((batch_tile, nb_movies), lambda i: (i, 0))

    return pl.pallas_call(
        sae_kernel,
        out_shape=jax.ShapeDtypeStruct((B, nb_movies), x.dtype),
        grid_spec=pltpu.PrefetchScalarGridSpec(
            num_scalar_prefetch=0,
            grid=(n_tiles,),
            in_specs=in_specs,
            out_specs=out_spec,
        ),
        compiler_params=pltpu.CompilerParams(
            dimension_semantics=("parallel",),
            vmem_limit_bytes=vmem_limit,
        ),
        cost_estimate=pl.CostEstimate(
            flops=int(flops),
            transcendentals=int(transcendentals),
            bytes_accessed=int(bytes_accessed),
        ),
    )(x, w1, b1, w2, b2, w3, b3, w4, b4)


def init_linear(key, fan_in, fan_out):
    """PyTorch nn.Linear-style init: U(-1/sqrt(in), 1/sqrt(in)).

    Weight is (in, out) so the kernel does x @ W + b; bias kept 2D (1, out)
    for clean lane-wise broadcasting on TPU.
    """
    kw, kb = jax.random.split(key)
    bound = 1.0 / jnp.sqrt(jnp.float32(fan_in))
    w = jax.random.uniform(kw, (fan_in, fan_out), jnp.float32, -bound, bound)
    b = jax.random.uniform(kb, (1, fan_out), jnp.float32, -bound, bound)
    return w, b


def sae_reference(x, params):
    """Pure-JAX reference for correctness checking."""
    (w1, b1), (w2, b2), (w3, b3), (w4, b4) = params
    h = jax.nn.sigmoid(x @ w1 + b1)
    h = jax.nn.sigmoid(h @ w2 + b2)
    h = jax.nn.sigmoid(h @ w3 + b3)
    return h @ w4 + b4


if __name__ == "__main__":
    # Small synthetic sizes consistent with the module; nb_movies is the
    # data-derived input feature count (deliberately NOT a multiple of 128 to
    # exercise the un-padded full-width block path), batch sized to give a
    # multi-step grid with a masked partial last tile.
    nb_movies = 300
    batch = 60

    key = jax.random.PRNGKey(0)
    k_x, k1, k2, k3, k4 = jax.random.split(key, 5)

    # Ratings-like input in [0, 5].
    x = jax.random.uniform(k_x, (batch, nb_movies), jnp.float32, 0.0, 5.0)

    params = (
        init_linear(k1, nb_movies, 20),  # fc1
        init_linear(k2, 20, 10),         # fc2
        init_linear(k3, 10, 20),         # fc3
        init_linear(k4, 20, nb_movies),  # fc4
    )

    out = sae_forward(x, params)
    out = jax.block_until_ready(out)

    ref = sae_reference(x, params)
    assert out.shape == (batch, nb_movies)
    assert out.dtype == jnp.float32
    assert jnp.allclose(out, ref, atol=1e-5, rtol=1e-5), "mismatch vs reference"

    print("KERNEL_OK")
</pallas_src>

<mosaic_0001>
module attributes {stable_mosaic.version = 11 : i64} {
  func.func @sae_kernel(%arg0: i32, %arg1: memref<32x300xf32, #tpu.memory_space<vmem>>, %arg2: memref<300x20xf32, #tpu.memory_space<vmem>>, %arg3: memref<1x20xf32, #tpu.memory_space<vmem>>, %arg4: memref<20x10xf32, #tpu.memory_space<vmem>>, %arg5: memref<1x10xf32, #tpu.memory_space<vmem>>, %arg6: memref<10x20xf32, #tpu.memory_space<vmem>>, %arg7: memref<1x20xf32, #tpu.memory_space<vmem>>, %arg8: memref<20x300xf32, #tpu.memory_space<vmem>>, %arg9: memref<1x300xf32, #tpu.memory_space<vmem>>, %arg10: memref<32x300xf32, #tpu.memory_space<vmem>>) attributes {dimension_semantics = [#tpu.dimension_semantics<parallel>], iteration_bounds = array<i64: 2>, scalar_prefetch = 0 : i64, scratch_operands = 0 : i64, tpu.core_type = #tpu.core_type<tc>, window_params = [{transform_indices = @transform_0, window_bounds = array<i64: 32, 300>}, {pipeline_mode = #tpu.pipeline_mode<synchronous>, transform_indices = @transform_1, window_bounds = array<i64: 300, 20>}, {pipeline_mode = #tpu.pipeline_mode<synchronous>, transform_indices = @transform_2, window_bounds = array<i64: 1, 20>}, {pipeline_mode = #tpu.pipeline_mode<synchronous>, transform_indices = @transform_3, window_bounds = array<i64: 20, 10>}, {pipeline_mode = #tpu.pipeline_mode<synchronous>, transform_indices = @transform_4, window_bounds = array<i64: 1, 10>}, {pipeline_mode = #tpu.pipeline_mode<synchronous>, transform_indices = @transform_5, window_bounds = array<i64: 10, 20>}, {pipeline_mode = #tpu.pipeline_mode<synchronous>, transform_indices = @transform_6, window_bounds = array<i64: 1, 20>}, {pipeline_mode = #tpu.pipeline_mode<synchronous>, transform_indices = @transform_7, window_bounds = array<i64: 20, 300>}, {pipeline_mode = #tpu.pipeline_mode<synchronous>, transform_indices = @transform_8, window_bounds = array<i64: 1, 300>}, {transform_indices = @transform_9, window_bounds = array<i64: 32, 300>}]} {
    %c0 = arith.constant 0 : index
    %c0_0 = arith.constant 0 : index
    %0 = vector.load %arg1[%c0, %c0_0] : memref<32x300xf32, #tpu.memory_space<vmem>>, vector<32x300xf32>
    %c0_1 = arith.constant 0 : index
    %c0_2 = arith.constant 0 : index
    %1 = vector.load %arg2[%c0_1, %c0_2] : memref<300x20xf32, #tpu.memory_space<vmem>>, vector<300x20xf32>
    %cst = arith.constant dense<0.000000e+00> : vector<32x20xf32>
    %2 = tpu.matmul %0, %1, %cst {dimension_numbers = #tpu.dot_dimension_numbers<[1], [0], [0], [1], [0, 0, 1, 1], [], []>} : vector<32x300xf32>, vector<300x20xf32>, vector<32x20xf32> -> vector<32x20xf32>
    %c0_3 = arith.constant 0 : index
    %c0_4 = arith.constant 0 : index
    %3 = vector.load %arg3[%c0_3, %c0_4] : memref<1x20xf32, #tpu.memory_space<vmem>>, vector<1x20xf32>
    %4 = vector.broadcast %3 : vector<1x20xf32> to vector<32x20xf32>
    %5 = arith.addf %2, %4 : vector<32x20xf32>
    %6 = arith.negf %5 : vector<32x20xf32>
    %7 = math.exp %6 : vector<32x20xf32>
    %cst_5 = arith.constant 1.000000e+00 : f32
    %8 = vector.broadcast %cst_5 : f32 to vector<32x20xf32>
    %9 = arith.addf %8, %7 : vector<32x20xf32>
    %10 = arith.divf %8, %9 : vector<32x20xf32>
    %c0_6 = arith.constant 0 : index
    %c0_7 = arith.constant 0 : index
    %11 = vector.load %arg4[%c0_6, %c0_7] : memref<20x10xf32, #tpu.memory_space<vmem>>, vector<20x10xf32>
    %cst_8 = arith.constant dense<0.000000e+00> : vector<32x10xf32>
    %12 = tpu.matmul %10, %11, %cst_8 {dimension_numbers = #tpu.dot_dimension_numbers<[1], [0], [0], [1], [0, 0, 1, 1], [], []>} : vector<32x20xf32>, vector<20x10xf32>, vector<32x10xf32> -> vector<32x10xf32>
    %c0_9 = arith.constant 0 : index
    %c0_10 = arith.constant 0 : index
    %13 = vector.load %arg5[%c0_9, %c0_10] : memref<1x10xf32, #tpu.memory_space<vmem>>, vector<1x10xf32>
    %14 = vector.broadcast %13 : vector<1x10xf32> to vector<32x10xf32>
    %15 = arith.addf %12, %14 : vector<32x10xf32>
    %16 = arith.negf %15 : vector<32x10xf32>
    %17 = math.exp %16 : vector<32x10xf32>
    %cst_11 = arith.constant 1.000000e+00 : f32
    %18 = vector.broadcast %cst_11 : f32 to vector<32x10xf32>
    %19 = arith.addf %18, %17 : vector<32x10xf32>
    %20 = arith.divf %18, %19 : vector<32x10xf32>
    %c0_12 = arith.constant 0 : index
    %c0_13 = arith.constant 0 : index
    %21 = vector.load %arg6[%c0_12, %c0_13] : memref<10x20xf32, #tpu.memory_space<vmem>>, vector<10x20xf32>
    %cst_14 = arith.constant dense<0.000000e+00> : vector<32x20xf32>
    %22 = tpu.matmul %20, %21, %cst_14 {dimension_numbers = #tpu.dot_dimension_numbers<[1], [0], [0], [1], [0, 0, 1, 1], [], []>} : vector<32x10xf32>, vector<10x20xf32>, vector<32x20xf32> -> vector<32x20xf32>
    %c0_15 = arith.constant 0 : index
    %c0_16 = arith.constant 0 : index
    %23 = vector.load %arg7[%c0_15, %c0_16] : memref<1x20xf32, #tpu.memory_space<vmem>>, vector<1x20xf32>
    %24 = vector.broadcast %23 : vector<1x20xf32> to vector<32x20xf32>
    %25 = arith.addf %22, %24 : vector<32x20xf32>
    %26 = arith.negf %25 : vector<32x20xf32>
    %27 = math.exp %26 : vector<32x20xf32>
    %cst_17 = arith.constant 1.000000e+00 : f32
    %28 = vector.broadcast %cst_17 : f32 to vector<32x20xf32>
    %29 = arith.addf %28, %27 : vector<32x20xf32>
    %30 = arith.divf %28, %29 : vector<32x20xf32>
    %c0_18 = arith.constant 0 : index
    %c0_19 = arith.constant 0 : index
    %31 = vector.load %arg8[%c0_18, %c0_19] : memref<20x300xf32, #tpu.memory_space<vmem>>, vector<20x300xf32>
    %cst_20 = arith.constant dense<0.000000e+00> : vector<32x300xf32>
    %32 = tpu.matmul %30, %31, %cst_20 {dimension_numbers = #tpu.dot_dimension_numbers<[1], [0], [0], [1], [0, 0, 1, 1], [], []>} : vector<32x20xf32>, vector<20x300xf32>, vector<32x300xf32> -> vector<32x300xf32>
    %c0_21 = arith.constant 0 : index
    %c0_22 = arith.constant 0 : index
    %33 = vector.load %arg9[%c0_21, %c0_22] : memref<1x300xf32, #tpu.memory_space<vmem>>, vector<1x300xf32>
    %34 = vector.broadcast %33 : vector<1x300xf32> to vector<32x300xf32>
    %35 = arith.addf %32, %34 : vector<32x300xf32>
    %c0_23 = arith.constant 0 : index
    %c0_24 = arith.constant 0 : index
    %36 = vector.load %arg10[%c0_23, %c0_24] : memref<32x300xf32, #tpu.memory_space<vmem>>, vector<32x300xf32>
    tpu.vector_store %arg10[%c0_23, %c0_24], %35 {strides = array<i32>} : memref<32x300xf32, #tpu.memory_space<vmem>>, vector<32x300xf32>,
    return
  }
  func.func @transform_0(%arg0: i32) -> (i32, i32) {
    %c0_i32 = arith.constant 0 : i32
    %c0_i32_0 = arith.constant 0 : i32
    return %arg0, %c0_i32 : i32, i32
  }
  func.func @transform_1(%arg0: i32) -> (i32, i32) {
    %c0_i32 = arith.constant 0 : i32
    %c0_i32_0 = arith.constant 0 : i32
    %c0_i32_1 = arith.constant 0 : i32
    return %c0_i32, %c0_i32_0 : i32, i32
  }
  func.func @transform_2(%arg0: i32) -> (i32, i32) {
    %c0_i32 = arith.constant 0 : i32
    %c0_i32_0 = arith.constant 0 : i32
    %c0_i32_1 = arith.constant 0 : i32
    return %c0_i32, %c0_i32_0 : i32, i32
  }
  func.func @transform_3(%arg0: i32) -> (i32, i32) {
    %c0_i32 = arith.constant 0 : i32
    %c0_i32_0 = arith.constant 0 : i32
    %c0_i32_1 = arith.constant 0 : i32
    return %c0_i32, %c0_i32_0 : i32, i32
  }
  func.func @transform_4(%arg0: i32) -> (i32, i32) {
    %c0_i32 = arith.constant 0 : i32
    %c0_i32_0 = arith.constant 0 : i32
    %c0_i32_1 = arith.constant 0 : i32
    return %c0_i32, %c0_i32_0 : i32, i32
  }
  func.func @transform_5(%arg0: i32) -> (i32, i32) {
    %c0_i32 = arith.constant 0 : i32
    %c0_i32_0 = arith.constant 0 : i32
    %c0_i32_1 = arith.constant 0 : i32
    return %c0_i32, %c0_i32_0 : i32, i32
  }
  func.func @transform_6(%arg0: i32) -> (i32, i32) {
    %c0_i32 = arith.constant 0 : i32
    %c0_i32_0 = arith.constant 0 : i32
    %c0_i32_1 = arith.constant 0 : i32
    return %c0_i32, %c0_i32_0 : i32, i32
  }
  func.func @transform_7(%arg0: i32) -> (i32, i32) {
    %c0_i32 = arith.constant 0 : i32
    %c0_i32_0 = arith.constant 0 : i32
    %c0_i32_1 = arith.constant 0 : i32
    return %c0_i32, %c0_i32_0 : i32, i32
  }
  func.func @transform_8(%arg0: i32) -> (i32, i32) {
    %c0_i32 = arith.constant 0 : i32
    %c0_i32_0 = arith.constant 0 : i32
    %c0_i32_1 = arith.constant 0 : i32
    return %c0_i32, %c0_i32_0 : i32, i32
  }
  func.func @transform_9(%arg0: i32) -> (i32, i32) {
    %c0_i32 = arith.constant 0 : i32
    %c0_i32_0 = arith.constant 0 : i32
    return %arg0, %c0_i32 : i32, i32
  }
}

</mosaic_0001>

<llo_original>
// kernel: tpu_custom_call.1
$region0: #{tpu_custom_call.1}
  #allocation0 [shape = 'u32[]', space=smem, size = 0x4, offset = 0x4, fixed_abs, tag = 'smem constant byte address 0x4 - core index']
  #allocation1 [shape = 'u32[72,128]{1,0:T(1,128)}', space=vmem, size = 0x9000, scoped, tag = 'internal scratch']
  %s0 = inlined_call_operand.vmem [shape: f32[60,300], index: 0, kind: input, shape index: {}]
  %s1 = inlined_call_operand.vmem [shape: f32[300,20], index: 1, kind: input, shape index: {}]
  %s2 = inlined_call_operand.vmem [shape: f32[1,20], index: 2, kind: input, shape index: {}]
  %s3 = inlined_call_operand.vmem [shape: f32[20,10], index: 3, kind: input, shape index: {}]
  %s4 = inlined_call_operand.vmem [shape: f32[1,10], index: 4, kind: input, shape index: {}]
  %s5 = inlined_call_operand.vmem [shape: f32[10,20], index: 5, kind: input, shape index: {}]
  %s6 = inlined_call_operand.vmem [shape: f32[1,20], index: 6, kind: input, shape index: {}]
  %s7 = inlined_call_operand.vmem [shape: f32[20,300], index: 7, kind: input, shape index: {}]
  %s8 = inlined_call_operand.vmem [shape: f32[1,300], index: 8, kind: input, shape index: {}]
  %s9 = inlined_call_operand.hbm [shape: f32[60,300], index: 9, kind: output, shape index: {}]
  %s10 = sld [smem:[#allocation0]]
  $region69: #{tpu_custom_call.1} parent=0
    _
  %s12 = ssub.s32 1, %s10
  %s13 = scalar_select 0, %s12, %s10
  $region1: #{tpu_custom_call.1} parent=0
    #allocation2 [shape = 'u8[98304]{0}', space=vmem, size = 0x18000, scoped, tag = 'output window, operand 0']
    #allocation3 [shape = 's32[2]{0}', space=sflag, size = 0x8, scoped, tag = 'scoped memory for tpu_custom_call.1']
    %14 = vsyncpa [#allocation3], 0
    %s15 = scalar_lea.sflag [#allocation3], 1
    %16 = vsyncpa %s15, 0
    loop: start=0, step=1, limit=4
    $region2: #{tpu_custom_call.1} parent=1 // loop_pre_header
      _
    $region3: #{tpu_custom_call.1} parent=1 // loop_header
      %s18 = sphi 0, %s22
      %p19 = scmp.ge.s32.totalorder %s18, 4
      %s28 = sphi 0, %s30
      %s31 = sphi 0, %s28
      %s32 = sphi 0, %s31
      %s48 = sphi 0, %s32
      %s52 = sphi 0, %s52
      %s54 = sphi 0, %s52
      %s55 = sphi 0, %s54
      %s69 = sphi 0, %s55
      %s73 = sphi 0, %s73
      %s75 = sphi 0, %s73
      %s76 = sphi 0, %s75
      %s90 = sphi 0, %s76
      %s94 = sphi 0, %s94
      %s96 = sphi 0, %s94
      %s97 = sphi 0, %s96
      %s111 = sphi 0, %s97
      %s115 = sphi 0, %s115
      %s117 = sphi 0, %s115
      %s118 = sphi 0, %s117
      %s132 = sphi 0, %s118
      %s136 = sphi 0, %s136
      %s138 = sphi 0, %s136
      %s139 = sphi 0, %s138
      %s153 = sphi 0, %s139
      %s157 = sphi 0, %s157
      %s159 = sphi 0, %s157
      %s160 = sphi 0, %s159
      %s174 = sphi 0, %s160
      %s178 = sphi 0, %s178
      %s180 = sphi 0, %s178
      %s181 = sphi 0, %s180
      %s195 = sphi 0, %s181
      %s199 = sphi 0, %s199
      %s201 = sphi 0, %s199
      %s202 = sphi 0, %s201
      %s216 = sphi 0, %s202
      %s222 = sphi 0, %s224
      %s225 = sphi 0, %s222
      %s226 = sphi 0, %s225
      %s242 = sphi 0, %s226
    $region4: #{tpu_custom_call.1} parent=1 // loop_header_branch
      %21 = sbr.rel (%p19) target = $region8
    $region5: #{tpu_custom_call.1} parent=1 // loop_body
      %s23 = ssub.s32 %s18, 1
      %s24 = ssub.s32 %s18, 2
      %s25 = sadd.s32 %s18, 1
      %s26 = ssub.s32 %s18, %s25
      %p27 = scmp.eq.s32.totalorder %s26, 0
      %s29 = sadd.s32 %s28, 1
      %s30 = scalar_select %p27, %s28, %s29
      %p33 = pneg %p27
      %p34 = scmp.eq.s32.totalorder %s18, 1
      %p35 = por %p33, %p34
      %p36 = scmp.ne.s32.totalorder %s28, %s31
      %p37 = scmp.eq.s32.totalorder %s18, 0
      %p38 = por %p36, %p37
      %p39 = scmp.ne.s32.totalorder %s28, %s31
      %p40 = scmp.eq.s32.totalorder %s23, 1
      %p41 = por %p39, %p40
      %p42 = scmp.ne.s32.totalorder %s31, %s32
      %p43 = scmp.eq.s32.totalorder %s23, 0
      %p44 = por %p42, %p43
      %p45 = scmp.ne.s32.totalorder %s31, %s32
      %p46 = scmp.eq.s32.totalorder %s24, 1
      %p47 = por %p45, %p46
      %p49 = scmp.ne.s32.totalorder %s32, %s48
      %p50 = scmp.eq.s32.totalorder %s24, 0
      %p51 = por %p49, %p50
      %s53 = sadd.s32 %s52, 1
      %p56 = scmp.eq.s32.totalorder %s18, 1
      %p57 = scmp.ne.s32.totalorder %s52, %s54
      %p58 = scmp.eq.s32.totalorder %s18, 0
      %p59 = por %p57, %p58
      %p60 = scmp.ne.s32.totalorder %s52, %s54
      %p61 = scmp.eq.s32.totalorder %s23, 1
      %p62 = por %p60, %p61
      %p63 = scmp.ne.s32.totalorder %s54, %s55
      %p64 = scmp.eq.s32.totalorder %s23, 0
      %p65 = por %p63, %p64
      %p66 = scmp.ne.s32.totalorder %s54, %s55
      %p67 = scmp.eq.s32.totalorder %s24, 1
      %p68 = por %p66, %p67
      %p70 = scmp.ne.s32.totalorder %s55, %s69
      %p71 = scmp.eq.s32.totalorder %s24, 0
      %p72 = por %p70, %p71
      %s74 = sadd.s32 %s73, 1
      %p77 = scmp.eq.s32.totalorder %s18, 1
      %p78 = scmp.ne.s32.totalorder %s73, %s75
      %p79 = scmp.eq.s32.totalorder %s18, 0
      %p80 = por %p78, %p79
      %p81 = scmp.ne.s32.totalorder %s73, %s75
      %p82 = scmp.eq.s32.totalorder %s23, 1
      %p83 = por %p81, %p82
      %p84 = scmp.ne.s32.totalorder %s75, %s76
      %p85 = scmp.eq.s32.totalorder %s23, 0
      %p86 = por %p84, %p85
      %p87 = scmp.ne.s32.totalorder %s75, %s76
      %p88 = scmp.eq.s32.totalorder %s24, 1
      %p89 = por %p87, %p88
      %p91 = scmp.ne.s32.totalorder %s76, %s90
      %p92 = scmp.eq.s32.totalorder %s24, 0
      %p93 = por %p91, %p92
      %s95 = sadd.s32 %s94, 1
      %p98 = scmp.eq.s32.totalorder %s18, 1
      %p99 = scmp.ne.s32.totalorder %s94, %s96
      %p100 = scmp.eq.s32.totalorder %s18, 0
      %p101 = por %p99, %p100
      %p102 = scmp.ne.s32.totalorder %s94, %s96
      %p103 = scmp.eq.s32.totalorder %s23, 1
      %p104 = por %p102, %p103
      %p105 = scmp.ne.s32.totalorder %s96, %s97
      %p106 = scmp.eq.s32.totalorder %s23, 0
      %p107 = por %p105, %p106
      %p108 = scmp.ne.s32.totalorder %s96, %s97
      %p109 = scmp.eq.s32.totalorder %s24, 1
      %p110 = por %p108, %p109
      %p112 = scmp.ne.s32.totalorder %s97, %s111
      %p113 = scmp.eq.s32.totalorder %s24, 0
      %p114 = por %p112, %p113
      %s116 = sadd.s32 %s115, 1
      %p119 = scmp.eq.s32.totalorder %s18, 1
      %p120 = scmp.ne.s32.totalorder %s115, %s117
      %p121 = scmp.eq.s32.totalorder %s18, 0
      %p122 = por %p120, %p121
      %p123 = scmp.ne.s32.totalorder %s115, %s117
      %p124 = scmp.eq.s32.totalorder %s23, 1
      %p125 = por %p123, %p124
      %p126 = scmp.ne.s32.totalorder %s117, %s118
      %p127 = scmp.eq.s32.totalorder %s23, 0
      %p128 = por %p126, %p127
      %p129 = scmp.ne.s32.totalorder %s117, %s118
      %p130 = scmp.eq.s32.totalorder %s24, 1
      %p131 = por %p129, %p130
      %p133 = scmp.ne.s32.totalorder %s118, %s132
      %p134 = scmp.eq.s32.totalorder %s24, 0
      %p135 = por %p133, %p134
      %s137 = sadd.s32 %s136, 1
      %p140 = scmp.eq.s32.totalorder %s18, 1
      %p141 = scmp.ne.s32.totalorder %s136, %s138
      %p142 = scmp.eq.s32.totalorder %s18, 0
      %p143 = por %p141, %p142
      %p144 = scmp.ne.s32.totalorder %s136, %s138
      %p145 = scmp.eq.s32.totalorder %s23, 1
      %p146 = por %p144, %p145
      %p147 = scmp.ne.s32.totalorder %s138, %s139
      %p148 = scmp.eq.s32.totalorder %s23, 0
      %p149 = por %p147, %p148
      %p150 = scmp.ne.s32.totalorder %s138, %s139
      %p151 = scmp.eq.s32.totalorder %s24, 1
      %p152 = por %p150, %p151
      %p154 = scmp.ne.s32.totalorder %s139, %s153
      %p155 = scmp.eq.s32.totalorder %s24, 0
      %p156 = por %p154, %p155
      %s158 = sadd.s32 %s157, 1
      %p161 = scmp.eq.s32.totalorder %s18, 1
      %p162 = scmp.ne.s32.totalorder %s157, %s159
      %p163 = scmp.eq.s32.totalorder %s18, 0
      %p164 = por %p162, %p163
      %p165 = scmp.ne.s32.totalorder %s157, %s159
      %p166 = scmp.eq.s32.totalorder %s23, 1
      %p167 = por %p165, %p166
      %p168 = scmp.ne.s32.totalorder %s159, %s160
      %p169 = scmp.eq.s32.totalorder %s23, 0
      %p170 = por %p168, %p169
      %p171 = scmp.ne.s32.totalorder %s159, %s160
      %p172 = scmp.eq.s32.totalorder %s24, 1
      %p173 = por %p171, %p172
      %p175 = scmp.ne.s32.totalorder %s160, %s174
      %p176 = scmp.eq.s32.totalorder %s24, 0
      %p177 = por %p175, %p176
      %s179 = sadd.s32 %s178, 1
      %p182 = scmp.eq.s32.totalorder %s18, 1
      %p183 = scmp.ne.s32.totalorder %s178, %s180
      %p184 = scmp.eq.s32.totalorder %s18, 0
      %p185 = por %p183, %p184
      %p186 = scmp.ne.s32.totalorder %s178, %s180
      %p187 = scmp.eq.s32.totalorder %s23, 1
      %p188 = por %p186, %p187
      %p189 = scmp.ne.s32.totalorder %s180, %s181
      %p190 = scmp.eq.s32.totalorder %s23, 0
      %p191 = por %p189, %p190
      %p192 = scmp.ne.s32.totalorder %s180, %s181
      %p193 = scmp.eq.s32.totalorder %s24, 1
      %p194 = por %p192, %p193
      %p196 = scmp.ne.s32.totalorder %s181, %s195
      %p197 = scmp.eq.s32.totalorder %s24, 0
      %p198 = por %p196, %p197
      %s200 = sadd.s32 %s199, 1
      %p203 = scmp.eq.s32.totalorder %s18, 1
      %p204 = scmp.ne.s32.totalorder %s199, %s201
      %p205 = scmp.eq.s32.totalorder %s18, 0
      %p206 = por %p204, %p205
      %p207 = scmp.ne.s32.totalorder %s199, %s201
      %p208 = scmp.eq.s32.totalorder %s23, 1
      %p209 = por %p207, %p208
      %p210 = scmp.ne.s32.totalorder %s201, %s202
      %p211 = scmp.eq.s32.totalorder %s23, 0
      %p212 = por %p210, %p211
      %p213 = scmp.ne.s32.totalorder %s201, %s202
      %p214 = scmp.eq.s32.totalorder %s24, 1
      %p215 = por %p213, %p214
      %p217 = scmp.ne.s32.totalorder %s202, %s216
      %p218 = scmp.eq.s32.totalorder %s24, 0
      %p219 = por %p217, %p218
      %s220 = ssub.s32 %s18, %s25
      %p221 = scmp.eq.s32.totalorder %s220, 0
      %s223 = sadd.s32 %s222, 1
      %s224 = scalar_select %p221, %s222, %s223
      %p227 = pneg %p221
      %p228 = scmp.eq.s32.totalorder %s18, 1
      %p229 = por %p227, %p228
      %p230 = scmp.ne.s32.totalorder %s222, %s225
      %p231 = scmp.eq.s32.totalorder %s18, 0
      %p232 = por %p230, %p231
      %p233 = scmp.ne.s32.totalorder %s222, %s225
      %p234 = scmp.eq.s32.totalorder %s23, 1
      %p235 = por %p233, %p234
      %p236 = scmp.ne.s32.totalorder %s225, %s226
      %p237 = scmp.eq.s32.totalorder %s23, 0
      %p238 = por %p236, %p237
      %p239 = scmp.ne.s32.totalorder %s225, %s226
      %p240 = scmp.eq.s32.totalorder %s24, 1
      %p241 = por %p239, %p240
      %p243 = scmp.ne.s32.totalorder %s226, %s242
      %p244 = scmp.eq.s32.totalorder %s24, 0
      %p245 = por %p243, %p244
      %p246 = scmp.le.s32.totalorder 1, %s18
      %p247 = scmp.lt.s32.totalorder %s18, 3
      %p248 = pnand %p246, %p247
      %p249 = pneg %p248
      // Predicated region
      $region9: #{tpu_custom_call.1} parent=5 // pred_check
        _
      $region10: #{tpu_custom_call.1} parent=5 // pred_check_branch
        %251 = sbr.rel (%p248) target = $region12
      $region11: #{tpu_custom_call.1} parent=5 // pred_region
        %s252 = ssub.s32 %s18, 1
        // Predicated region
        $region13: #{tpu_custom_call.1} parent=11 // pred_check
          %p253 = pneg %p65
        $region14: #{tpu_custom_call.1} parent=11 // pred_check_branch
          %255 = sbr.rel (%p253) target = $region16
        $region15: #{tpu_custom_call.1} parent=11 // pred_region
          _
        $region16: #{tpu_custom_call.1} parent=11 // pred_fallthru
          _
        // Predicated region
        $region17: #{tpu_custom_call.1} parent=11 // pred_check
          %p256 = pneg %p86
        $region18: #{tpu_custom_call.1} parent=11 // pred_check_branch
          %258 = sbr.rel (%p256) target = $region20
        $region19: #{tpu_custom_call.1} parent=11 // pred_region
          _
        $region20: #{tpu_custom_call.1} parent=11 // pred_fallthru
          _
        // Predicated region
        $region21: #{tpu_custom_call.1} parent=11 // pred_check
          %p259 = pneg %p107
        $region22: #{tpu_custom_call.1} parent=11 // pred_check_branch
          %261 = sbr.rel (%p259) target = $region24
        $region23: #{tpu_custom_call.1} parent=11 // pred_region
          _
        $region24: #{tpu_custom_call.1} parent=11 // pred_fallthru
          _
        // Predicated region
        $region25: #{tpu_custom_call.1} parent=11 // pred_check
          %p262 = pneg %p128
        $region26: #{tpu_custom_call.1} parent=11 // pred_check_branch
          %264 = sbr.rel (%p262) target = $region28
        $region27: #{tpu_custom_call.1} parent=11 // pred_region
          _
        $region28: #{tpu_custom_call.1} parent=11 // pred_fallthru
          _
        // Predicated region
        $region29: #{tpu_custom_call.1} parent=11 // pred_check
          %p265 = pneg %p149
        $region30: #{tpu_custom_call.1} parent=11 // pred_check_branch
          %267 = sbr.rel (%p265) target = $region32
        $region31: #{tpu_custom_call.1} parent=11 // pred_region
          _
        $region32: #{tpu_custom_call.1} parent=11 // pred_fallthru
          _
        // Predicated region
        $region33: #{tpu_custom_call.1} parent=11 // pred_check
          %p268 = pneg %p170
        $region34: #{tpu_custom_call.1} parent=11 // pred_check_branch
          %270 = sbr.rel (%p268) target = $region36
        $region35: #{tpu_custom_call.1} parent=11 // pred_region
          _
        $region36: #{tpu_custom_call.1} parent=11 // pred_fallthru
          _
        // Predicated region
        $region37: #{tpu_custom_call.1} parent=11 // pred_check
          %p271 = pneg %p191
        $region38: #{tpu_custom_call.1} parent=11 // pred_check_branch
          %273 = sbr.rel (%p271) target = $region40
        $region39: #{tpu_custom_call.1} parent=11 // pred_region
          _
        $region40: #{tpu_custom_call.1} parent=11 // pred_fallthru
          _
        // Predicated region
        $region41: #{tpu_custom_call.1} parent=11 // pred_check
          %p274 = pneg %p212
        $region42: #{tpu_custom_call.1} parent=11 // pred_check_branch
          %276 = sbr.rel (%p274) target = $region44
        $region43: #{tpu_custom_call.1} parent=11 // pred_region
          _
        $region44: #{tpu_custom_call.1} parent=11 // pred_fallthru
          _
      $region12: #{tpu_custom_call.1} parent=5 // pred_fallthru
        _
      %p277 = scmp.lt.s32.totalorder %s18, 2
      // Predicated region
      $region45: #{tpu_custom_call.1} parent=5 // pred_check
        %p278 = pneg %p277
      $region46: #{tpu_custom_call.1} parent=5 // pred_check_branch
        %280 = sbr.rel (%p278) target = $region48
      $region47: #{tpu_custom_call.1} parent=5 // pred_region
        // Predicated region
        $region49: #{tpu_custom_call.1} parent=47 // pred_check
          %p281 = pneg %p38
        $region50: #{tpu_custom_call.1} parent=47 // pred_check_branch
          %283 = sbr.rel (%p281) target = $region52
        $region51: #{tpu_custom_call.1} parent=47 // pred_region
          %s284 = smul.u32 4, %s18
          %p285 = scmp.lt.s32.totalorder %s284, 7
          %s286 = scalar_select %p285, %s284, 7
          %s287 = smul.addr %s286, 3
          %s288 = smul.addr %s287, 8
          %s289 = scalar_lea.vmem %s0, %s288
          %s290 = smul.u32 4, %s18
        $region52: #{tpu_custom_call.1} parent=47 // pred_fallthru
          _
      $region48: #{tpu_custom_call.1} parent=5 // pred_fallthru
        _
      %p291 = scmp.le.s32.totalorder 1, %s18
      %p292 = scmp.lt.s32.totalorder %s18, 3
      %p293 = pnand %p291, %p292
      %p294 = pneg %p293
      // Predicated region
      $region53: #{tpu_custom_call.1} parent=5 // pred_check
        _
      $region54: #{tpu_custom_call.1} parent=5 // pred_check_branch
        %296 = sbr.rel (%p293) target = $region56
      $region55: #{tpu_custom_call.1} parent=5 // pred_region
        %s297 = ssub.s32 %s18, 1
        %s298 = smul.u32 4, %s23
        %p299 = scmp.lt.s32.totalorder %s298, 7
        %s300 = scalar_select %p299, %s298, 7
        %s301 = smul.addr %s300, 3
        %s302 = smul.addr %s301, 8
        %s303 = scalar_lea.vmem %s0, %s302
        %p304 = pneg %p44
        %p305 = pneg %p41
        %p306 = pneg %p65
        %p307 = pneg %p62
        %p308 = pneg %p86
        %p309 = pneg %p83
        %p310 = pneg %p107
        %p311 = pneg %p104
        %p312 = pneg %p128
        %p313 = pneg %p125
        %p314 = pneg %p149
        %p315 = pneg %p146
        %p316 = pneg %p170
        %p317 = pneg %p167
        %p318 = pneg %p191
        %p319 = pneg %p188
        %p320 = pneg %p212
        %p321 = pneg %p209
        %p322 = pneg %p238
        %p323 = pneg %p235
        %s324 = sand.u32 %s225, 1
        %s325 = scalar_lea.sflag [#allocation3], %s324
        %s326 = sand.u32 %s225, 1
        %s327 = smul.addr %s326, 96
        %s328 = scalar_lea.vmem [#allocation2], %s327
        %s329 = smul.u32 4, %s23
        %p330 = scmp.lt.s32.totalorder %s329, 7
        %s331 = scalar_select %p330, %s329, 7
        %s332 = smul.addr %s331, 3
        %s333 = smul.addr %s332, 8
        %s334 = scalar_lea.vmem %s0, %s333
        %s335 = smul.u32 4, %s23
        %s336 = smul.u32 4, %s23
        %v337 = vld [vmem:[%s334] sm:$0xff]
        %v338 = vld [vmem:[%s334 + $0x8] sm:$0xff]
        %v339 = vld [vmem:[%s334 + $0x10] sm:$0xff]
        %v340 = vld [vmem:[%s334 + $0x18] sm:$0xff]
        %v341 = vld [vmem:[%s334 + $0x20] sm:$0xff]
        %v342 = vld [vmem:[%s334 + $0x28] sm:$0xff]
        %v343 = vld [vmem:[%s334 + $0x30] sm:$0xff]
        %v344 = vld [vmem:[%s334 + $0x38] sm:$0xff]
        %v345 = vld [vmem:[%s334 + $0x40] sm:$0xff]
        %v346 = vld [vmem:[%s334 + $0x48] sm:$0xff]
        %v347 = vld [vmem:[%s334 + $0x50] sm:$0xff]
        %v348 = vld [vmem:[%s334 + $0x58] sm:$0xff]
        %v349 = vld [vmem:[%s1] sm:$0xff]
        %v350 = vld [vmem:[%s1 + $0x8] sm:$0xff]
        %v351 = vld [vmem:[%s1 + $0x10] sm:$0xff]
        %v352 = vld [vmem:[%s1 + $0x18] sm:$0xff]
        %v353 = vld [vmem:[%s1 + $0x20] sm:$0xff]
        %v354 = vld [vmem:[%s1 + $0x28] sm:$0xff]
        %v355 = vld [vmem:[%s1 + $0x30] sm:$0xff]
        %v356 = vld [vmem:[%s1 + $0x38] sm:$0xff]
        %v357 = vld [vmem:[%s1 + $0x40] sm:$0xff]
        %v358 = vld [vmem:[%s1 + $0x48] sm:$0xff]
        %v359 = vld [vmem:[%s1 + $0x50] sm:$0xff]
        %v360 = vld [vmem:[%s1 + $0x58] sm:$0xff]
        %v361 = vld [vmem:[%s1 + $0x60] sm:$0xff]
        %v362 = vld [vmem:[%s1 + $0x68] sm:$0xff]
        %v363 = vld [vmem:[%s1 + $0x70] sm:$0xff]
        %v364 = vld [vmem:[%s1 + $0x78] sm:$0xff]
        %v365 = vld [vmem:[%s1 + $0x80] sm:$0xff]
        %v366 = vld [vmem:[%s1 + $0x88] sm:$0xff]
        %v367 = vld [vmem:[%s1 + $0x90] sm:$0xff]
        %v368 = vld [vmem:[%s1 + $0x98] sm:$0xff]
        %v369 = vld [vmem:[%s1 + $0xa0] sm:$0xff]
        %v370 = vld [vmem:[%s1 + $0xa8] sm:$0xff]
        %v371 = vld [vmem:[%s1 + $0xb0] sm:$0xff]
        %v372 = vld [vmem:[%s1 + $0xb8] sm:$0xff]
        %v373 = vld [vmem:[%s1 + $0xc0] sm:$0xff]
        %v374 = vld [vmem:[%s1 + $0xc8] sm:$0xff]
        %v375 = vld [vmem:[%s1 + $0xd0] sm:$0xff]
        %v376 = vld [vmem:[%s1 + $0xd8] sm:$0xff]
        %v377 = vld [vmem:[%s1 + $0xe0] sm:$0xff]
        %v378 = vld [vmem:[%s1 + $0xe8] sm:$0xff]
        %v379 = vld [vmem:[%s1 + $0xf0] sm:$0xff]
        %v380 = vld [vmem:[%s1 + $0xf8] sm:$0xff]
        %v381 = vld [vmem:[%s1 + $0x100] sm:$0xff]
        %v382 = vld [vmem:[%s1 + $0x108] sm:$0xff]
        %v383 = vld [vmem:[%s1 + $0x110] sm:$0xff]
        %v384 = vld [vmem:[%s1 + $0x118] sm:$0xff]
        %v385 = vld [vmem:[%s1 + $0x120] sm:$0xff]
        %v386 = vld [vmem:[%s1 + $0x128] sm:$0xf]
        %v387 = vld [vmem:[%s2] sm:$0x1]
        %v389 = vperm.slane %v387, 0
        %vm391 = vcmask 359424
        %v393 = vsel %vm391, %v339, 0
        %v396 = vsel %vm391, %v342, 0
        %v399 = vsel %vm391, %v345, 0
        %v402 = vsel %vm391, %v348, 0
        %vm404 = vcmask 1043456
        %v406 = vsel %vm404, %v386, 0
        %408 = vmatpush.msra.mxu0 %v364
        %409 = vmatpush.msra.mxu0 %v363
        %410 = vmatpush.msra.mxu0 %v362
        %411 = vmatpush.msra.mxu0 %v361
        %412 = vmatpush.msra.mxu0 %v360
        %413 = vmatpush.msra.mxu0 %v359
        %414 = vmatpush.msra.mxu0 %v358
        %415 = vmatpush.msra.mxu0 %v357
        %416 = vmatpush.msra.mxu0 %v356
        %417 = vmatpush.msra.mxu0 %v355
        %418 = vmatpush.msra.mxu0 %v354
        %419 = vmatpush.msra.mxu0 %v353
        %420 = vmatpush.msra.mxu0 %v352
        %421 = vmatpush.msra.mxu0 %v351
        %422 = vmatpush.msra.mxu0 %v350
        %423 = vmatpush.msra.mxu0 %v349
        %424 = vmatmul.f32.gmra.mxu0 %v337
        %v425 = vpop.f32.mrf.mxu0
        %v426 = vadd.f32 %v389, %v425
        %427 = vmatmul.f32.gmra.mxu0 %v340
        %v428 = vpop.f32.mrf.mxu0
        %v429 = vadd.f32 %v389, %v428
        %430 = vmatmul.f32.gmra.mxu0 %v343
        %v431 = vpop.f32.mrf.mxu0
        %v432 = vadd.f32 %v389, %v431
        %433 = vmatmul.f32.gmra.mxu0 %v346
        %v434 = vpop.f32.mrf.mxu0
        %v435 = vadd.f32 %v389, %v434
        %436 = vdwg.mxu0
        %437 = vmatpush.msra.mxu0 %v380
        %438 = vmatpush.msra.mxu0 %v379
        %439 = vmatpush.msra.mxu0 %v378
        %440 = vmatpush.msra.mxu0 %v377
        %441 = vmatpush.msra.mxu0 %v376
        %442 = vmatpush.msra.mxu0 %v375
        %443 = vmatpush.msra.mxu0 %v374
        %444 = vmatpush.msra.mxu0 %v373
        %445 = vmatpush.msra.mxu0 %v372
        %446 = vmatpush.msra.mxu0 %v371
        %447 = vmatpush.msra.mxu0 %v370
        %448 = vmatpush.msra.mxu0 %v369
        %449 = vmatpush.msra.mxu0 %v368
        %450 = vmatpush.msra.mxu0 %v367
        %451 = vmatpush.msra.mxu0 %v366
        %452 = vmatpush.msra.mxu0 %v365
        %453 = vmatmul.f32.gmra.mxu0 %v338
        %v454 = vpop.f32.mrf.mxu0
        %v455 = vadd.f32 %v426, %v454
        %456 = vmatmul.f32.gmra.mxu0 %v341
        %v457 = vpop.f32.mrf.mxu0
        %v458 = vadd.f32 %v429, %v457
        %459 = vmatmul.f32.gmra.mxu0 %v344
        %v460 = vpop.f32.mrf.mxu0
        %v461 = vadd.f32 %v432, %v460
        %462 = vmatmul.f32.gmra.mxu0 %v347
        %v463 = vpop.f32.mrf.mxu0
        %v464 = vadd.f32 %v435, %v463
        %465 = vdwg.mxu0
        %466 = vmatpush.msra.mxu0 0.0
        %467 = vmatpush.msra.mxu0 0.0
        %468 = vmatpush.msra.mxu0 0.0
        %469 = vmatpush.msra.mxu0 0.0
        %470 = vmatpush.msra.mxu0 0.0
        %471 = vmatpush.msra.mxu0 0.0
        %472 = vmatpush.msra.mxu0 0.0
        %473 = vmatpush.msra.mxu0 0.0
        %474 = vmatpush.msra.mxu0 0.0
        %475 = vmatpush.msra.mxu0 0.0
        %476 = vmatpush.msra.mxu0 %v406
        %477 = vmatpush.msra.mxu0 %v385
        %478 = vmatpush.msra.mxu0 %v384
        %479 = vmatpush.msra.mxu0 %v383
        %480 = vmatpush.msra.mxu0 %v382
        %481 = vmatpush.msra.mxu0 %v381
        %482 = vmatmul.f32.gmra.mxu0 %v393
        %v483 = vpop.f32.mrf.mxu0
        %v484 = vadd.f32 %v455, %v483
        %485 = vmatmul.f32.gmra.mxu0 %v396
        %v486 = vpop.f32.mrf.mxu0
        %v487 = vadd.f32 %v458, %v486
        %488 = vmatmul.f32.gmra.mxu0 %v399
        %v489 = vpop.f32.mrf.mxu0
        %v490 = vadd.f32 %v461, %v489
        %491 = vmatmul.f32.gmra.mxu0 %v402
        %v492 = vpop.f32.mrf.mxu0
        %v493 = vadd.f32 %v464, %v492
        %494 = vdwg.mxu0
        %v495 = vxor.u32 %v484, 2147483648
        %v496 = vxor.u32 %v487, 2147483648
        %v497 = vxor.u32 %v490, 2147483648
        %v498 = vxor.u32 %v493, 2147483648
        %v499 = vmul.f32 %v495, 1.442695
        %v500 = vpow.pop %v499
        %v501 = vmul.f32 %v496, 1.442695
        %v502 = vpow.pop %v501
        %v503 = vmul.f32 %v497, 1.442695
        %v504 = vpow.pop %v503
        %v505 = vmul.f32 %v498, 1.442695
        %v506 = vpow.pop %v505
        %v507 = vadd.f32 %v500, 1.0
        %v508 = vadd.f32 %v502, 1.0
        %v509 = vadd.f32 %v504, 1.0
        %v510 = vadd.f32 %v506, 1.0
        %v511 = vrcp.pop %v507
        %v512 = vmul.f32 %v507, %v511
        %v513 = vsub.f32 1.0, %v512
        %v514 = vmul.f32 %v511, %v513
        %v515 = vadd.f32 %v511, %v514
        %vm516 = vweird.f32 %v507
        %vm517 = vweird.f32 %v511
        %vm518 = vmor %vm516, %vm517
        %v519 = vsel %vm518, %v511, %v515
        %v520 = vand.u32 2147483647, %v507
        %vm521 = vcmp.eq.f32.partialorder %v520, 8.507059e+37
        %v522 = vand.u32 %v507, 2147483648
        %v523 = vor.u32 1.1754944e-38, %v522
        %v524 = vsel %vm521, %v523, %v519
        %v525 = vmul.f32 1.0, %v524
        %v526 = vrcp.pop %v508
        %v527 = vmul.f32 %v508, %v526
        %v528 = vsub.f32 1.0, %v527
        %v529 = vmul.f32 %v526, %v528
        %v530 = vadd.f32 %v526, %v529
        %vm531 = vweird.f32 %v508
        %vm532 = vweird.f32 %v526
        %vm533 = vmor %vm531, %vm532
        %v534 = vsel %vm533, %v526, %v530
        %v535 = vand.u32 2147483647, %v508
        %vm536 = vcmp.eq.f32.partialorder %v535, 8.507059e+37
        %v537 = vand.u32 %v508, 2147483648
        %v538 = vor.u32 1.1754944e-38, %v537
        %v539 = vsel %vm536, %v538, %v534
        %v540 = vmul.f32 1.0, %v539
        %v541 = vrcp.pop %v509
        %v542 = vmul.f32 %v509, %v541
        %v543 = vsub.f32 1.0, %v542
        %v544 = vmul.f32 %v541, %v543
        %v545 = vadd.f32 %v541, %v544
        %vm546 = vweird.f32 %v509
        %vm547 = vweird.f32 %v541
        %vm548 = vmor %vm546, %vm547
        %v549 = vsel %vm548, %v541, %v545
        %v550 = vand.u32 2147483647, %v509
        %vm551 = vcmp.eq.f32.partialorder %v550, 8.507059e+37
        %v552 = vand.u32 %v509, 2147483648
        %v553 = vor.u32 1.1754944e-38, %v552
        %v554 = vsel %vm551, %v553, %v549
        %v555 = vmul.f32 1.0, %v554
        %v556 = vrcp.pop %v510
        %v557 = vmul.f32 %v510, %v556
        %v558 = vsub.f32 1.0, %v557
        %v559 = vmul.f32 %v556, %v558
        %v560 = vadd.f32 %v556, %v559
        %vm561 = vweird.f32 %v510
        %vm562 = vweird.f32 %v556
        %vm563 = vmor %vm561, %vm562
        %v564 = vsel %vm563, %v556, %v560
        %v565 = vand.u32 2147483647, %v510
        %vm566 = vcmp.eq.f32.partialorder %v565, 8.507059e+37
        %v567 = vand.u32 %v510, 2147483648
        %v568 = vor.u32 1.1754944e-38, %v567
        %v569 = vsel %vm566, %v568, %v564
        %v570 = vmul.f32 1.0, %v569
        %v571 = vld [vmem:[%s3] sm:$0xff]
        %v572 = vld [vmem:[%s3 + $0x8] sm:$0xff]
        %v573 = vld [vmem:[%s3 + $0x10] sm:$0xf]
        %v574 = vld [vmem:[%s4] sm:$0x1]
        %v576 = vperm.slane %v574, 0
        %vm578 = vcmask 162816
        %v580 = vsel %vm578, %v525, 0
        %v583 = vsel %vm578, %v540, 0
        %v586 = vsel %vm578, %v555, 0
        %v589 = vsel %vm578, %v570, 0
        %v592 = vsel %vm404, %v573, 0
        %594 = vmatpush.msra.mxu0 0.0
        %595 = vmatpush.msra.mxu0 0.0
        %596 = vmatpush.msra.mxu0 0.0
        %597 = vmatpush.msra.mxu0 0.0
        %598 = vmatpush.msra.mxu0 0.0
        %599 = vmatpush.msra.mxu0 0.0
        %600 = vmatpush.msra.mxu0 0.0
        %601 = vmatpush.msra.mxu0 0.0
        %602 = vmatpush.msra.mxu0 0.0
        %603 = vmatpush.msra.mxu0 0.0
        %604 = vmatpush.msra.mxu0 0.0
        %605 = vmatpush.msra.mxu0 0.0
        %606 = vmatpush.msra.mxu0 0.0
        %607 = vmatpush.msra.mxu0 %v592
        %608 = vmatpush.msra.mxu0 %v572
        %609 = vmatpush.msra.mxu0 %v571
        %610 = vmatmul.f32.gmra.mxu0 %v580
        %v611 = vpop.f32.mrf.mxu0
        %v612 = vadd.f32 %v576, %v611
        %613 = vmatmul.f32.gmra.mxu0 %v583
        %v614 = vpop.f32.mrf.mxu0
        %v615 = vadd.f32 %v576, %v614
        %616 = vmatmul.f32.gmra.mxu0 %v586
        %v617 = vpop.f32.mrf.mxu0
        %v618 = vadd.f32 %v576, %v617
        %619 = vmatmul.f32.gmra.mxu0 %v589
        %v620 = vpop.f32.mrf.mxu0
        %v621 = vadd.f32 %v576, %v620
        %622 = vdwg.mxu0
        %v623 = vxor.u32 %v612, 2147483648
        %v624 = vxor.u32 %v615, 2147483648
        %v625 = vxor.u32 %v618, 2147483648
        %v626 = vxor.u32 %v621, 2147483648
        %v627 = vmul.f32 %v623, 1.442695
        %v628 = vpow.pop %v627
        %v629 = vmul.f32 %v624, 1.442695
        %v630 = vpow.pop %v629
        %v631 = vmul.f32 %v625, 1.442695
        %v632 = vpow.pop %v631
        %v633 = vmul.f32 %v626, 1.442695
        %v634 = vpow.pop %v633
        %v635 = vadd.f32 %v628, 1.0
        %v636 = vadd.f32 %v630, 1.0
        %v637 = vadd.f32 %v632, 1.0
        %v638 = vadd.f32 %v634, 1.0
        %v639 = vrcp.pop %v635
        %v640 = vmul.f32 %v635, %v639
        %v641 = vsub.f32 1.0, %v640
        %v642 = vmul.f32 %v639, %v641
        %v643 = vadd.f32 %v639, %v642
        %vm644 = vweird.f32 %v635
        %vm645 = vweird.f32 %v639
        %vm646 = vmor %vm644, %vm645
        %v647 = vsel %vm646, %v639, %v643
        %v648 = vand.u32 2147483647, %v635
        %vm649 = vcmp.eq.f32.partialorder %v648, 8.507059e+37
        %v650 = vand.u32 %v635, 2147483648
        %v651 = vor.u32 1.1754944e-38, %v650
        %v652 = vsel %vm649, %v651, %v647
        %v653 = vmul.f32 1.0, %v652
        %v654 = vrcp.pop %v636
        %v655 = vmul.f32 %v636, %v654
        %v656 = vsub.f32 1.0, %v655
        %v657 = vmul.f32 %v654, %v656
        %v658 = vadd.f32 %v654, %v657
        %vm659 = vweird.f32 %v636
        %vm660 = vweird.f32 %v654
        %vm661 = vmor %vm659, %vm660
        %v662 = vsel %vm661, %v654, %v658
        %v663 = vand.u32 2147483647, %v636
        %vm664 = vcmp.eq.f32.partialorder %v663, 8.507059e+37
        %v665 = vand.u32 %v636, 2147483648
        %v666 = vor.u32 1.1754944e-38, %v665
        %v667 = vsel %vm664, %v666, %v662
        %v668 = vmul.f32 1.0, %v667
        %v669 = vrcp.pop %v637
        %v670 = vmul.f32 %v637, %v669
        %v671 = vsub.f32 1.0, %v670
        %v672 = vmul.f32 %v669, %v671
        %v673 = vadd.f32 %v669, %v672
        %vm674 = vweird.f32 %v637
        %vm675 = vweird.f32 %v669
        %vm676 = vmor %vm674, %vm675
        %v677 = vsel %vm676, %v669, %v673
        %v678 = vand.u32 2147483647, %v637
        %vm679 = vcmp.eq.f32.partialorder %v678, 8.507059e+37
        %v680 = vand.u32 %v637, 2147483648
        %v681 = vor.u32 1.1754944e-38, %v680
        %v682 = vsel %vm679, %v681, %v677
        %v683 = vmul.f32 1.0, %v682
        %v684 = vrcp.pop %v638
        %v685 = vmul.f32 %v638, %v684
        %v686 = vsub.f32 1.0, %v685
        %v687 = vmul.f32 %v684, %v686
        %v688 = vadd.f32 %v684, %v687
        %vm689 = vweird.f32 %v638
        %vm690 = vweird.f32 %v684
        %vm691 = vmor %vm689, %vm690
        %v692 = vsel %vm691, %v684, %v688
        %v693 = vand.u32 2147483647, %v638
        %vm694 = vcmp.eq.f32.partialorder %v693, 8.507059e+37
        %v695 = vand.u32 %v638, 2147483648
        %v696 = vor.u32 1.1754944e-38, %v695
        %v697 = vsel %vm694, %v696, %v692
        %v698 = vmul.f32 1.0, %v697
        %v699 = vld [vmem:[%s5] sm:$0xff]
        %v700 = vld [vmem:[%s5 + $0x8] sm:$0x3]
        %v701 = vld [vmem:[%s6] sm:$0x1]
        %v703 = vperm.slane %v701, 0
        %vm705 = vcmask 80896
        %v707 = vsel %vm705, %v653, 0
        %v710 = vsel %vm705, %v668, 0
        %v713 = vsel %vm705, %v683, 0
        %v716 = vsel %vm705, %v698, 0
        %vm718 = vcmask 1041408
        %v720 = vsel %vm718, %v700, 0
        %722 = vmatpush.msra.mxu0 0.0
        %723 = vmatpush.msra.mxu0 0.0
        %724 = vmatpush.msra.mxu0 0.0
        %725 = vmatpush.msra.mxu0 0.0
        %726 = vmatpush.msra.mxu0 0.0
        %727 = vmatpush.msra.mxu0 0.0
        %728 = vmatpush.msra.mxu0 0.0
        %729 = vmatpush.msra.mxu0 0.0
        %730 = vmatpush.msra.mxu0 0.0
        %731 = vmatpush.msra.mxu0 0.0
        %732 = vmatpush.msra.mxu0 0.0
        %733 = vmatpush.msra.mxu0 0.0
        %734 = vmatpush.msra.mxu0 0.0
        %735 = vmatpush.msra.mxu0 0.0
        %736 = vmatpush.msra.mxu0 %v720
        %737 = vmatpush.msra.mxu0 %v699
        %738 = vmatmul.f32.gmra.mxu0 %v707
        %v739 = vpop.f32.mrf.mxu0
        %v740 = vadd.f32 %v703, %v739
        %741 = vmatmul.f32.gmra.mxu0 %v710
        %v742 = vpop.f32.mrf.mxu0
        %v743 = vadd.f32 %v703, %v742
        %744 = vmatmul.f32.gmra.mxu0 %v713
        %v745 = vpop.f32.mrf.mxu0
        %v746 = vadd.f32 %v703, %v745
        %747 = vmatmul.f32.gmra.mxu0 %v716
        %v748 = vpop.f32.mrf.mxu0
        %v749 = vadd.f32 %v703, %v748
        %750 = vdwg.mxu0
        %v751 = vxor.u32 %v740, 2147483648
        %v752 = vxor.u32 %v743, 2147483648
        %v753 = vxor.u32 %v746, 2147483648
        %v754 = vxor.u32 %v749, 2147483648
        %v755 = vmul.f32 %v751, 1.442695
        %v756 = vpow.pop %v755
        %v757 = vmul.f32 %v752, 1.442695
        %v758 = vpow.pop %v757
        %v759 = vmul.f32 %v753, 1.442695
        %v760 = vpow.pop %v759
        %v761 = vmul.f32 %v754, 1.442695
        %v762 = vpow.pop %v761
        %v763 = vadd.f32 %v756, 1.0
        %v764 = vadd.f32 %v758, 1.0
        %v765 = vadd.f32 %v760, 1.0
        %v766 = vadd.f32 %v762, 1.0
        %v767 = vrcp.pop %v763
        %v768 = vmul.f32 %v763, %v767
        %v769 = vsub.f32 1.0, %v768
        %v770 = vmul.f32 %v767, %v769
        %v771 = vadd.f32 %v767, %v770
        %vm772 = vweird.f32 %v763
        %vm773 = vweird.f32 %v767
        %vm774 = vmor %vm772, %vm773
        %v775 = vsel %vm774, %v767, %v771
        %v776 = vand.u32 2147483647, %v763
        %vm777 = vcmp.eq.f32.partialorder %v776, 8.507059e+37
        %v778 = vand.u32 %v763, 2147483648
        %v779 = vor.u32 1.1754944e-38, %v778
        %v780 = vsel %vm777, %v779, %v775
        %v781 = vmul.f32 1.0, %v780
        %v782 = vrcp.pop %v764
        %v783 = vmul.f32 %v764, %v782
        %v784 = vsub.f32 1.0, %v783
        %v785 = vmul.f32 %v782, %v784
        %v786 = vadd.f32 %v782, %v785
        %vm787 = vweird.f32 %v764
        %vm788 = vweird.f32 %v782
        %vm789 = vmor %vm787, %vm788
        %v790 = vsel %vm789, %v782, %v786
        %v791 = vand.u32 2147483647, %v764
        %vm792 = vcmp.eq.f32.partialorder %v791, 8.507059e+37
        %v793 = vand.u32 %v764, 2147483648
        %v794 = vor.u32 1.1754944e-38, %v793
        %v795 = vsel %vm792, %v794, %v790
        %v796 = vmul.f32 1.0, %v795
        %v797 = vrcp.pop %v765
        %v798 = vmul.f32 %v765, %v797
        %v799 = vsub.f32 1.0, %v798
        %v800 = vmul.f32 %v797, %v799
        %v801 = vadd.f32 %v797, %v800
        %vm802 = vweird.f32 %v765
        %vm803 = vweird.f32 %v797
        %vm804 = vmor %vm802, %vm803
        %v805 = vsel %vm804, %v797, %v801
        %v806 = vand.u32 2147483647, %v765
        %vm807 = vcmp.eq.f32.partialorder %v806, 8.507059e+37
        %v808 = vand.u32 %v765, 2147483648
        %v809 = vor.u32 1.1754944e-38, %v808
        %v810 = vsel %vm807, %v809, %v805
        %v811 = vmul.f32 1.0, %v810
        %v812 = vrcp.pop %v766
        %v813 = vmul.f32 %v766, %v812
        %v814 = vsub.f32 1.0, %v813
        %v815 = vmul.f32 %v812, %v814
        %v816 = vadd.f32 %v812, %v815
        %vm817 = vweird.f32 %v766
        %vm818 = vweird.f32 %v812
        %vm819 = vmor %vm817, %vm818
        %v820 = vsel %vm819, %v812, %v816
        %v821 = vand.u32 2147483647, %v766
        %vm822 = vcmp.eq.f32.partialorder %v821, 8.507059e+37
        %v823 = vand.u32 %v766, 2147483648
        %v824 = vor.u32 1.1754944e-38, %v823
        %v825 = vsel %vm822, %v824, %v820
        %v826 = vmul.f32 1.0, %v825
        %v827 = vld [vmem:[%s7] sm:$0xff]
        %v828 = vld [vmem:[%s7 + $0x8] sm:$0xff]
        %v829 = vld [vmem:[%s7 + $0x10] sm:$0xff]
        %v830 = vld [vmem:[%s7 + $0x18] sm:$0xff]
        %v831 = vld [vmem:[%s7 + $0x20] sm:$0xff]
        %v832 = vld [vmem:[%s7 + $0x28] sm:$0xff]
        %v833 = vld [vmem:[%s7 + $0x30] sm:$0xf]
        %v834 = vld [vmem:[%s7 + $0x38] sm:$0xf]
        %v835 = vld [vmem:[%s7 + $0x40] sm:$0xf]
        %v836 = vld [vmem:[%s8] sm:$0x7]
        %v838 = vperm.slane %v836, 0
        %v839 = vperm.slane %v836, 1
        %v840 = vperm.slane %v836, 2
        %v845 = vsel %vm578, %v781, 0
        %v848 = vsel %vm578, %v796, 0
        %v851 = vsel %vm578, %v811, 0
        %v854 = vsel %vm578, %v826, 0
        %v857 = vsel %vm404, %v833, 0
        %v860 = vsel %vm404, %v834, 0
        %v863 = vsel %vm404, %v835, 0
        %865 = vmatpush.msra.mxu0 0.0
        %866 = vmatpush.msra.mxu0 0.0
        %867 = vmatpush.msra.mxu0 0.0
        %868 = vmatpush.msra.mxu0 0.0
        %869 = vmatpush.msra.mxu0 0.0
        %870 = vmatpush.msra.mxu0 0.0
        %871 = vmatpush.msra.mxu0 0.0
        %872 = vmatpush.msra.mxu0 0.0
        %873 = vmatpush.msra.mxu0 0.0
        %874 = vmatpush.msra.mxu0 0.0
        %875 = vmatpush.msra.mxu0 0.0
        %876 = vmatpush.msra.mxu0 0.0
        %877 = vmatpush.msra.mxu0 0.0
        %878 = vmatpush.msra.mxu0 %v857
        %879 = vmatpush.msra.mxu0 %v830
        %880 = vmatpush.msra.mxu0 %v827
        %881 = vmatmul.f32.gmra.mxu0 %v845
        %v882 = vpop.f32.mrf.mxu0
        %v883 = vadd.f32 %v838, %v882
        %884 = vmatmul.f32.gmra.mxu0 %v848
        %v885 = vpop.f32.mrf.mxu0
        %v886 = vadd.f32 %v838, %v885
        %887 = vmatmul.f32.gmra.mxu0 %v851
        %v888 = vpop.f32.mrf.mxu0
        %v889 = vadd.f32 %v838, %v888
        %890 = vmatmul.f32.gmra.mxu0 %v854
        %v891 = vpop.f32.mrf.mxu0
        %v892 = vadd.f32 %v838, %v891
        %893 = vdwg.mxu0
        %894 = vmatpush.msra.mxu0 0.0
        %895 = vmatpush.msra.mxu0 0.0
        %896 = vmatpush.msra.mxu0 0.0
        %897 = vmatpush.msra.mxu0 0.0
        %898 = vmatpush.msra.mxu0 0.0
        %899 = vmatpush.msra.mxu0 0.0
        %900 = vmatpush.msra.mxu0 0.0
        %901 = vmatpush.msra.mxu0 0.0
        %902 = vmatpush.msra.mxu0 0.0
        %903 = vmatpush.msra.mxu0 0.0
        %904 = vmatpush.msra.mxu0 0.0
        %905 = vmatpush.msra.mxu0 0.0
        %906 = vmatpush.msra.mxu0 0.0
        %907 = vmatpush.msra.mxu0 %v860
        %908 = vmatpush.msra.mxu0 %v831
        %909 = vmatpush.msra.mxu0 %v828
        %910 = vmatmul.f32.gmra.mxu0 %v845
        %v911 = vpop.f32.mrf.mxu0
        %v912 = vadd.f32 %v839, %v911
        %913 = vmatmul.f32.gmra.mxu0 %v848
        %v914 = vpop.f32.mrf.mxu0
        %v915 = vadd.f32 %v839, %v914
        %916 = vmatmul.f32.gmra.mxu0 %v851
        %v917 = vpop.f32.mrf.mxu0
        %v918 = vadd.f32 %v839, %v917
        %919 = vmatmul.f32.gmra.mxu0 %v854
        %v920 = vpop.f32.mrf.mxu0
        %v921 = vadd.f32 %v839, %v920
        %922 = vdwg.mxu0
        %923 = vmatpush.msra.mxu0 0.0
        %924 = vmatpush.msra.mxu0 0.0
        %925 = vmatpush.msra.mxu0 0.0
        %926 = vmatpush.msra.mxu0 0.0
        %927 = vmatpush.msra.mxu0 0.0
        %928 = vmatpush.msra.mxu0 0.0
        %929 = vmatpush.msra.mxu0 0.0
        %930 = vmatpush.msra.mxu0 0.0
        %931 = vmatpush.msra.mxu0 0.0
        %932 = vmatpush.msra.mxu0 0.0
        %933 = vmatpush.msra.mxu0 0.0
        %934 = vmatpush.msra.mxu0 0.0
        %935 = vmatpush.msra.mxu0 0.0
        %936 = vmatpush.msra.mxu0 %v863
        %937 = vmatpush.msra.mxu0 %v832
        %938 = vmatpush.msra.mxu0 %v829
        %939 = vmatmul.f32.gmra.mxu0 %v845
        %v940 = vpop.f32.mrf.mxu0
        %v941 = vadd.f32 %v840, %v940
        %942 = vmatmul.f32.gmra.mxu0 %v848
        %v943 = vpop.f32.mrf.mxu0
        %v944 = vadd.f32 %v840, %v943
        %945 = vmatmul.f32.gmra.mxu0 %v851
        %v946 = vpop.f32.mrf.mxu0
        %v947 = vadd.f32 %v840, %v946
        %948 = vmatmul.f32.gmra.mxu0 %v854
        %v949 = vpop.f32.mrf.mxu0
        %v950 = vadd.f32 %v840, %v949
        %951 = vdwg.mxu0
        %952 = vst [vmem:[%s328] sm:$0xff] %v883
        %953 = vst [vmem:[%s328 + $0x8] sm:$0xff] %v912
        %954 = vst.msk [vmem:[%s328 + $0x10] sm:$0xff] %vm391, %v941
        %955 = vst [vmem:[%s328 + $0x18] sm:$0xff] %v886
        %956 = vst [vmem:[%s328 + $0x20] sm:$0xff] %v915
        %957 = vst.msk [vmem:[%s328 + $0x28] sm:$0xff] %vm391, %v944
        %958 = vst [vmem:[%s328 + $0x30] sm:$0xff] %v889
        %959 = vst [vmem:[%s328 + $0x38] sm:$0xff] %v918
        %960 = vst.msk [vmem:[%s328 + $0x40] sm:$0xff] %vm391, %v947
        %961 = vst [vmem:[%s328 + $0x48] sm:$0xff] %v892
        %962 = vst [vmem:[%s328 + $0x50] sm:$0xff] %v921
        %963 = vst.msk [vmem:[%s328 + $0x58] sm:$0xff] %vm391, %v950
        %s964 = sand.u32 %s225, 1
        %s965 = scalar_lea.sflag [#allocation3], %s964
        %s966 = sand.u32 %s225, 1
        %s967 = smul.addr %s966, 96
        %s968 = scalar_lea.vmem [#allocation2], %s967
        // Predicated region
        $region57: #{tpu_custom_call.1} parent=55 // pred_check
          %p969 = pneg %p235
        $region58: #{tpu_custom_call.1} parent=55 // pred_check_branch
          %971 = sbr.rel (%p969) target = $region60
        $region59: #{tpu_custom_call.1} parent=55 // pred_region
          %s972 = smul.u32 4, %s23
          %974 = vsyncadd %s965, 0
          %s975 = smul.addr %s972, 3
          %s976 = smul.addr %s975, 8
          %s977 = scalar_lea.hbm %s9, %s976
          %s978 = sshll.u32 %s968, 4
          %s979 = int_to_ptr.vmem [resolvable:$true] %s978
          %s980 = sshll.u32 %s977, 4
          %s981 = int_to_ptr.hbm [resolvable:$true] %s980
          %986 = dma.vmem_to_hbm [thread:$0]  %s979, 1536, %s981, %s965, 384, 384, 24
        $region60: #{tpu_custom_call.1} parent=55 // pred_fallthru
          _
      $region56: #{tpu_custom_call.1} parent=5 // pred_fallthru
        _
      %p987 = scmp.le.s32.totalorder 2, %s18
      // Predicated region
      $region61: #{tpu_custom_call.1} parent=5 // pred_check
        %p988 = pneg %p987
      $region62: #{tpu_custom_call.1} parent=5 // pred_check_branch
        %990 = sbr.rel (%p988) target = $region64
      $region63: #{tpu_custom_call.1} parent=5 // pred_region
        %s991 = ssub.s32 %s18, 2
        // Predicated region
        $region65: #{tpu_custom_call.1} parent=63 // pred_check
          %p992 = pneg %p241
        $region66: #{tpu_custom_call.1} parent=63 // pred_check_branch
          %994 = sbr.rel (%p992) target = $region68
        $region67: #{tpu_custom_call.1} parent=63 // pred_region
          %s995 = sand.u32 %s226, 1
          %s996 = scalar_lea.sflag [#allocation3], %s995
          %s997 = sand.u32 %s226, 1
          %s998 = smul.addr %s997, 96
          %s999 = scalar_lea.vmem [#allocation2], %s998
          %1001 = dma.done %s996, 1536
        $region68: #{tpu_custom_call.1} parent=63 // pred_fallthru
          _
      $region64: #{tpu_custom_call.1} parent=5 // pred_fallthru
        _
    $region6: #{tpu_custom_call.1} parent=1 // loop_footer
      %s22 = sadd.s32 1, %s18
    $region7: #{tpu_custom_call.1} parent=1 // loop_footer_branch
      %17 = sbr.rel target = $region3
    $region8: #{tpu_custom_call.1} parent=1 // loop_exit
      _
    %1002 = vsyncpa [#allocation3], 1
    %s1003 = scalar_lea.sflag [#allocation3], 1
    %1004 = vsyncpa %s1003, 1

</llo_original>
